<compile_context>
chip_gen: v5e
topology: v5e:2x2
jax: 0.10.0
libtpu: 0.0.40
codegen_flags: <defaults>
</compile_context>

<pallas_src>
import jax
import jax.numpy as jnp
from jax.experimental import pallas as pl
from jax.experimental.pallas import tpu as pltpu


def _invert_mean_kernel(y_ref, o_ref):
    # y_ref: (B, tile_cols) block. Per-column mean over axis 0 (sublane
    # reduction, XLU), then reflect about the mean: out = 2*mean - y (VPU).
    y = y_ref[...].astype(jnp.float32)
    mean = jnp.mean(y, axis=0, keepdims=True)
    o_ref[...] = (2.0 * mean - y).astype(o_ref.dtype)


def invert_mean_array(y: jax.Array) -> jax.Array:
    """Computes 2*mean(y, axis=0) - y via a Pallas TPU kernel."""
    assert y.ndim >= 1, "InvertMean needs at least one axis to reduce over"
    orig_shape = y.shape
    B = orig_shape[0]
    F = 1
    for d in orig_shape[1:]:
        F *= d
    F = max(F, 1)
    y2 = y.reshape(B, F)

    itemsize = jnp.dtype(y.dtype).itemsize

    # Column tile: multiple of 128 lanes, sized for ~2 MiB blocks so that
    # in+out double-buffering (~4x block bytes) stays well under the scoped
    # VMEM default on all of v5e/v6e/v7x.
    max_block_bytes = 2 * 1024 * 1024
    tile_cols = max(128, ((max_block_bytes // max(B * itemsize, 1)) // 128) * 128)
    # Never larger than the (128-rounded) number of columns.
    tile_cols = min(tile_cols, pl.cdiv(F, 128) * 128)

    # Partial last block (when tile_cols does not divide F) is handled by
    # Pallas OOB masking: the op is column-independent, so garbage OOB input
    # lanes only produce garbage OOB output lanes, whose stores are dropped.
    grid = (pl.cdiv(F, tile_cols),)

    out2 = pl.pallas_call(
        _invert_mean_kernel,
        out_shape=jax.ShapeDtypeStruct((B, F), y2.dtype),
        grid_spec=pltpu.PrefetchScalarGridSpec(
            num_scalar_prefetch=0,
            grid=grid,
            in_specs=[pl.BlockSpec((B, tile_cols), lambda j: (0, j))],
            out_specs=pl.BlockSpec((B, tile_cols), lambda j: (0, j)),
        ),
        compiler_params=pltpu.CompilerParams(
            dimension_semantics=("parallel",)),
        cost_estimate=pl.CostEstimate(
            flops=3 * B * F,
            transcendentals=0,
            bytes_accessed=2 * B * F * itemsize),
    )(y2)

    return out2.reshape(orig_shape)


class InvertMean:
    """JAX/Pallas port of the PyTorch InvertMean module.

    The Bernoulli(prob) gate is a host-level decision (torch.rand(1) < prob
    drives a Python `if` in the original), driven here by an explicit JAX key.
    """

    def __init__(self, prob=0.5):
        self.prob = prob

    def __call__(self, data: dict, key=None) -> dict:
        data = dict(data)  # shallow copy, same as the PyTorch version
        if key is not None:
            u = float(jax.random.uniform(key, ()))
        else:
            u = 0.0  # deterministic fallback: apply iff prob > 0
        if u < self.prob:
            data['y'] = invert_mean_array(data['y'])
        return data


if __name__ == "__main__":
    key = jax.random.PRNGKey(0)
    k1, k2, k3 = jax.random.split(key, 3)

    # Small NCHW-style example: batch=2, channels=4, spatial=16x16.
    y = jax.random.normal(k1, (2, 4, 16, 16), dtype=jnp.float32)
    other = jax.random.normal(k2, (2, 8), dtype=jnp.float32)
    data = {"y": y, "other": other}

    # prob=1.0 so the Pallas path runs deterministically.
    module = InvertMean(prob=1.0)
    out = module(data, key=k3)
    jax.block_until_ready(out["y"])

    # Reference: mean over dim 0, then reflect about it (== 2*mean - y).
    mean = jnp.mean(y, axis=0)
    ref = -(y - mean) + mean

    assert out["y"].shape == y.shape and out["y"].dtype == y.dtype
    assert jnp.allclose(out["y"], ref, atol=1e-5, rtol=1e-5)
    # Untouched key passes through unchanged.
    assert out["other"] is other

    # Non-128-multiple feature size exercises the partial-last-block path.
    y_odd = jax.random.normal(k2, (3, 5, 7, 9), dtype=jnp.float32)
    out_odd = invert_mean_array(y_odd)
    jax.block_until_ready(out_odd)
    ref_odd = 2.0 * jnp.mean(y_odd, axis=0) - y_odd
    assert jnp.allclose(out_odd, ref_odd, atol=1e-5, rtol=1e-5)

    # prob=0.0 path leaves the tensor untouched.
    out_noop = InvertMean(prob=0.0)(data, key=k3)
    assert out_noop["y"] is y

    print("KERNEL_OK")
</pallas_src>

<mosaic_0001>
module attributes {stable_mosaic.version = 11 : i64} {
  func.func @_invert_mean_kernel(%arg0: i32, %arg1: memref<2x1024xf32, #tpu.memory_space<vmem>>, %arg2: memref<2x1024xf32, #tpu.memory_space<vmem>>) attributes {dimension_semantics = [#tpu.dimension_semantics<parallel>], iteration_bounds = array<i64: 1>, scalar_prefetch = 0 : i64, scratch_operands = 0 : i64, tpu.core_type = #tpu.core_type<tc>, window_params = [{transform_indices = @transform_0, window_bounds = array<i64: 2, 1024>}, {transform_indices = @transform_1, window_bounds = array<i64: 2, 1024>}]} {
    %c0 = arith.constant 0 : index
    %c0_0 = arith.constant 0 : index
    %0 = vector.load %arg1[%c0, %c0_0] : memref<2x1024xf32, #tpu.memory_space<vmem>>, vector<2x1024xf32>
    %cst = arith.constant dense<0.000000e+00> : vector<1024xf32>
    %1 = vector.multi_reduction <add>, %0, %cst [0] : vector<2x1024xf32> to vector<1024xf32>
    %2 = vector.shape_cast %1 : vector<1024xf32> to vector<1x1024xf32>
    %cst_1 = arith.constant 2.000000e+00 : f32
    %3 = vector.broadcast %cst_1 : f32 to vector<1x1024xf32>
    %4 = arith.divf %2, %3 : vector<1x1024xf32>
    %cst_2 = arith.constant 2.000000e+00 : f32
    %5 = vector.broadcast %cst_2 : f32 to vector<1x1024xf32>
    %6 = arith.mulf %5, %4 : vector<1x1024xf32>
    %7 = vector.broadcast %6 : vector<1x1024xf32> to vector<2x1024xf32>
    %8 = arith.subf %7, %0 : vector<2x1024xf32>
    %c0_3 = arith.constant 0 : index
    %c0_4 = arith.constant 0 : index
    %9 = vector.load %arg2[%c0_3, %c0_4] : memref<2x1024xf32, #tpu.memory_space<vmem>>, vector<2x1024xf32>
    tpu.vector_store %arg2[%c0_3, %c0_4], %8 {strides = array<i32>} : memref<2x1024xf32, #tpu.memory_space<vmem>>, vector<2x1024xf32>,
    return
  }
  func.func @transform_0(%arg0: i32) -> (i32, i32) {
    %c0_i32 = arith.constant 0 : i32
    %c0_i32_0 = arith.constant 0 : i32
    return %c0_i32, %arg0 : i32, i32
  }
  func.func @transform_1(%arg0: i32) -> (i32, i32) {
    %c0_i32 = arith.constant 0 : i32
    %c0_i32_0 = arith.constant 0 : i32
    return %c0_i32, %arg0 : i32, i32
  }
}

</mosaic_0001>

<llo_original>
// kernel: tpu_custom_call.1
$region0: #{tpu_custom_call.1}
  #allocation0 [shape = 'u32[]', space=smem, size = 0x4, offset = 0x4, fixed_abs, tag = 'smem constant byte address 0x4 - core index']
  #allocation1 [shape = 'u32[72,128]{1,0:T(1,128)}', space=vmem, size = 0x9000, scoped, tag = 'internal scratch']
  %s0 = inlined_call_operand.hbm [shape: f32[2,1024], index: 0, kind: input, shape index: {}]
  %s1 = inlined_call_operand.hbm [shape: f32[2,1024], index: 1, kind: output, shape index: {}]
  %s2 = sld [smem:[#allocation0]]
  $region18: #{tpu_custom_call.1} parent=0
    _
  %s4 = ssub.s32 1, %s2
  %s5 = scalar_select 0, %s4, %s2
  $region1: #{tpu_custom_call.1} parent=0
    #allocation2 [shape = 'u8[8192]{0}', space=vmem, size = 0x2000, scoped, tag = 'input window, operand 0, single buffered']
    #allocation3 [shape = 's32[1]{0}', space=sflag, size = 0x4, scoped, tag = 'scoped memory for tpu_custom_call.1']
    #allocation4 [shape = 's32[1]{0}', space=sflag, size = 0x4, scoped, tag = 'scoped memory for tpu_custom_call.1']
    #allocation5 [shape = 'u8[8192]{0}', space=vmem, size = 0x2000, scoped, tag = 'output window, operand 0, single buffered']
    %6 = vsyncpa [#allocation3], 0
    %7 = vsyncpa [#allocation4], 0
    // Predicated region
    $region2: #{tpu_custom_call.1} parent=1 // pred_check
      _
    $region3: #{tpu_custom_call.1} parent=1 // pred_check_branch
      %9 = sbr.rel (0) target = $region5
    $region4: #{tpu_custom_call.1} parent=1 // pred_region
      %11 = vsyncadd [#allocation3], 0
      %s13 = sshll.u32 %s0, 4
      %s14 = int_to_ptr.hbm [resolvable:$true] %s13
      %s15 = sshll.u32 [#allocation2], 4
      %s16 = int_to_ptr.vmem [resolvable:$true] %s15
      %18 = dma.hbm_to_vmem [thread:$0]  %s14, 256, %s16, [#allocation3]
    $region5: #{tpu_custom_call.1} parent=1 // pred_fallthru
      _
    // Predicated region
    $region6: #{tpu_custom_call.1} parent=1 // pred_check
      _
    $region7: #{tpu_custom_call.1} parent=1 // pred_check_branch
      %20 = sbr.rel (0) target = $region9
    $region8: #{tpu_custom_call.1} parent=1 // pred_region
      %22 = dma.done [#allocation3], 256
    $region9: #{tpu_custom_call.1} parent=1 // pred_fallthru
      _
    %v23 = vld [vmem:[#allocation2] sm:$0xff]
    %v24 = vld [vmem:[#allocation2 + $0x8] sm:$0xff]
    %27 = vst [vmem:[#allocation1] ss:$4 sm:$0xff] %v23
    %s28 = scalar_lea.vmem [#allocation1], 32
    %29 = vst [vmem:[%s28] ss:$4 sm:$0xff] %v24
    %v30 = vld.sshfl [vmem:[#allocation1] sm:$0xff pattern:$0x73625140]
    %v31 = vld.sshfl [vmem:[#allocation1 + $0x8] sm:$0xff pattern:$0x73625140]
    %v32 = vld.sshfl [vmem:[#allocation1 + $0x10] sm:$0xff pattern:$0x73625140]
    %v33 = vld.sshfl [vmem:[#allocation1 + $0x18] sm:$0xff pattern:$0x73625140]
    %v34 = vld.sshfl [vmem:[#allocation1 + $0x20] sm:$0xff pattern:$0x73625140]
    %v35 = vld.sshfl [vmem:[#allocation1 + $0x28] sm:$0xff pattern:$0x73625140]
    %v36 = vld.sshfl [vmem:[#allocation1 + $0x30] sm:$0xff pattern:$0x73625140]
    %v37 = vld.sshfl [vmem:[#allocation1 + $0x38] sm:$0xff pattern:$0x73625140]
    %vm46 = vcmask 1041408
    %v47 = vsel %vm46, %v30, 0.0
    %v48 = vrot.slane %v47, 4
    %v49 = vadd.f32 %v47, %v48
    %v50 = vrot.slane %v49, 2
    %v51 = vadd.f32 %v49, %v50
    %v52 = vrot.slane %v51, 1
    %v53 = vadd.f32 %v51, %v52
    %v54 = vsel %vm46, %v31, 0.0
    %v55 = vrot.slane %v54, 4
    %v56 = vadd.f32 %v54, %v55
    %v57 = vrot.slane %v56, 2
    %v58 = vadd.f32 %v56, %v57
    %v59 = vrot.slane %v58, 1
    %v60 = vadd.f32 %v58, %v59
    %v61 = vsel %vm46, %v32, 0.0
    %v62 = vrot.slane %v61, 4
    %v63 = vadd.f32 %v61, %v62
    %v64 = vrot.slane %v63, 2
    %v65 = vadd.f32 %v63, %v64
    %v66 = vrot.slane %v65, 1
    %v67 = vadd.f32 %v65, %v66
    %v68 = vsel %vm46, %v33, 0.0
    %v69 = vrot.slane %v68, 4
    %v70 = vadd.f32 %v68, %v69
    %v71 = vrot.slane %v70, 2
    %v72 = vadd.f32 %v70, %v71
    %v73 = vrot.slane %v72, 1
    %v74 = vadd.f32 %v72, %v73
    %v75 = vsel %vm46, %v34, 0.0
    %v76 = vrot.slane %v75, 4
    %v77 = vadd.f32 %v75, %v76
    %v78 = vrot.slane %v77, 2
    %v79 = vadd.f32 %v77, %v78
    %v80 = vrot.slane %v79, 1
    %v81 = vadd.f32 %v79, %v80
    %v82 = vsel %vm46, %v35, 0.0
    %v83 = vrot.slane %v82, 4
    %v84 = vadd.f32 %v82, %v83
    %v85 = vrot.slane %v84, 2
    %v86 = vadd.f32 %v84, %v85
    %v87 = vrot.slane %v86, 1
    %v88 = vadd.f32 %v86, %v87
    %v89 = vsel %vm46, %v36, 0.0
    %v90 = vrot.slane %v89, 4
    %v91 = vadd.f32 %v89, %v90
    %v92 = vrot.slane %v91, 2
    %v93 = vadd.f32 %v91, %v92
    %v94 = vrot.slane %v93, 1
    %v95 = vadd.f32 %v93, %v94
    %v96 = vsel %vm46, %v37, 0.0
    %v97 = vrot.slane %v96, 4
    %v98 = vadd.f32 %v96, %v97
    %v99 = vrot.slane %v98, 2
    %v100 = vadd.f32 %v98, %v99
    %v101 = vrot.slane %v100, 1
    %v102 = vadd.f32 %v100, %v101
    %v103 = vrcp.pop 2.0
    %v104 = vmul.f32 2.0, %v103
    %v105 = vsub.f32 1.0, %v104
    %v106 = vmul.f32 %v103, %v105
    %v107 = vadd.f32 %v103, %v106
    %vm108 = vweird.f32 %v103
    %v109 = vsel %vm108, %v103, %v107
    %v110 = vmul.f32 %v53, %v109
    %v111 = vmul.f32 %v60, %v109
    %v112 = vmul.f32 %v67, %v109
    %v113 = vmul.f32 %v74, %v109
    %v114 = vmul.f32 %v81, %v109
    %v115 = vmul.f32 %v88, %v109
    %v116 = vmul.f32 %v95, %v109
    %v117 = vmul.f32 %v102, %v109
    %v118 = vmul.f32 %v110, 2.0
    %v119 = vmul.f32 %v111, 2.0
    %v120 = vmul.f32 %v112, 2.0
    %v121 = vmul.f32 %v113, 2.0
    %v122 = vmul.f32 %v114, 2.0
    %v123 = vmul.f32 %v115, 2.0
    %v124 = vmul.f32 %v116, 2.0
    %v125 = vmul.f32 %v117, 2.0
    %126 = vst [vmem:[#allocation1] ss:$4 sm:$0xff] %v23
    %s127 = scalar_lea.vmem [#allocation1], 32
    %128 = vst [vmem:[%s127] ss:$4 sm:$0xff] %v24
    %v129 = vld.sshfl [vmem:[#allocation1] sm:$0xff pattern:$0x73625140]
    %v130 = vld.sshfl [vmem:[#allocation1 + $0x8] sm:$0xff pattern:$0x73625140]
    %v131 = vld.sshfl [vmem:[#allocation1 + $0x10] sm:$0xff pattern:$0x73625140]
    %v132 = vld.sshfl [vmem:[#allocation1 + $0x18] sm:$0xff pattern:$0x73625140]
    %v133 = vld.sshfl [vmem:[#allocation1 + $0x20] sm:$0xff pattern:$0x73625140]
    %v134 = vld.sshfl [vmem:[#allocation1 + $0x28] sm:$0xff pattern:$0x73625140]
    %v135 = vld.sshfl [vmem:[#allocation1 + $0x30] sm:$0xff pattern:$0x73625140]
    %v136 = vld.sshfl [vmem:[#allocation1 + $0x38] sm:$0xff pattern:$0x73625140]
    %v145 = vsub.f32 %v118, %v129
    %v146 = vsub.f32 %v119, %v130
    %v147 = vsub.f32 %v120, %v131
    %v148 = vsub.f32 %v121, %v132
    %v149 = vsub.f32 %v122, %v133
    %v150 = vsub.f32 %v123, %v134
    %v151 = vsub.f32 %v124, %v135
    %v152 = vsub.f32 %v125, %v136
    %v161 = vrot.slane %v146, 6
    %v162 = vrot.slane %v147, 4
    %v163 = vrot.slane %v148, 2
    %v164 = vrot.slane %v150, 6
    %v165 = vrot.slane %v151, 4
    %v166 = vrot.slane %v152, 2
    %v167 = vsel %vm46, %v145, %v161
    %vm168 = vcmask 1045508
    %v169 = vsel %vm168, %v162, %v163
    %vm170 = vcmask 1043456
    %v171 = vsel %vm170, %v167, %v169
    %v172 = vsel %vm46, %v149, %v164
    %v173 = vsel %vm168, %v165, %v166
    %v174 = vsel %vm170, %v172, %v173
    %177 = vst [vmem:[#allocation5] sm:$0xff] %v171
    %178 = vst [vmem:[#allocation5 + $0x8] sm:$0xff] %v174
    // Predicated region
    $region10: #{tpu_custom_call.1} parent=1 // pred_check
      _
    $region11: #{tpu_custom_call.1} parent=1 // pred_check_branch
      %180 = sbr.rel (0) target = $region13
    $region12: #{tpu_custom_call.1} parent=1 // pred_region
      %182 = vsyncadd [#allocation4], 0
      %s184 = sshll.u32 [#allocation5], 4
      %s185 = int_to_ptr.vmem [resolvable:$true] %s184
      %s186 = sshll.u32 %s1, 4
      %s187 = int_to_ptr.hbm [resolvable:$true] %s186
      %189 = dma.vmem_to_hbm [thread:$0]  %s185, 256, %s187, [#allocation4]
    $region13: #{tpu_custom_call.1} parent=1 // pred_fallthru
      _
    // Predicated region
    $region14: #{tpu_custom_call.1} parent=1 // pred_check
      _
    $region15: #{tpu_custom_call.1} parent=1 // pred_check_branch
      %191 = sbr.rel (0) target = $region17
    $region16: #{tpu_custom_call.1} parent=1 // pred_region
      %193 = dma.done [#allocation4], 256
    $region17: #{tpu_custom_call.1} parent=1 // pred_fallthru
      _
    %194 = vsyncpa [#allocation3], 1
    %195 = vsyncpa [#allocation4], 1

</llo_original>
